<compile_context>
chip_gen: v6e
topology: v6e:2x2x1
jax: 0.10.0
libtpu: 0.0.40
codegen_flags: <defaults>
</compile_context>

<pallas_src>
import functools
import math

import jax
import jax.numpy as jnp
from jax.experimental import pallas as pl
from jax.experimental.pallas import tpu as pltpu

_MIB = 1024 * 1024
_RESIDENT_TABLE_BUDGET = 40 * _MIB   # Path-A eligibility: safe inside v7x's 64 MiB VMEM.


# ----------------------------------------------------------------------------
# Parameter construction (mirrors the PyTorch module).
# ----------------------------------------------------------------------------
def create_sinusoidal_embeddings(n_positions: int, dimension: int) -> jnp.ndarray:
    """PE[pos, 2i] = sin(pos / 10000^(2i/dim)); PE[pos, 2i+1] = cos(...)."""
    pos = jnp.arange(n_positions, dtype=jnp.float32)[:, None]        # (P, 1)
    i = jnp.arange(dimension // 2, dtype=jnp.float32)[None, :]       # (1, D/2)
    angle = pos / jnp.power(10000.0, (2.0 * i) / dimension)          # (P, D/2)
    pe = jnp.zeros((n_positions, dimension), dtype=jnp.float32)
    pe = pe.at[:, 0::2].set(jnp.sin(angle))
    pe = pe.at[:, 1::2].set(jnp.cos(angle))
    return pe


def init_gpt_embedding_params(key, vocabulary_size, embedding_size,
                              n_max_positions, padding_index=None,
                              dtype=jnp.float32):
    """Deterministic init mirroring nn.Embedding (N(0,1) weights)."""
    w = jax.random.normal(key, (vocabulary_size, embedding_size), jnp.float32)
    if padding_index is not None:
        w = w.at[padding_index, :].set(0.0)
    pe = create_sinusoidal_embeddings(n_max_positions, embedding_size)
    return w.astype(dtype), pe.astype(dtype)


# ----------------------------------------------------------------------------
# Path A: VMEM-resident table, in-kernel row gather.
# ----------------------------------------------------------------------------
def _resident_gather_kernel(tok_ref, table_ref, pos_ref, out_ref):
    # tok_ref  : SMEM (B*S_pad,) int32  scalar-prefetched, clamped token ids
    # table_ref: VMEM (V, E)            resident (constant index_map -> one DMA)
    # pos_ref  : VMEM (S_pad, E)        resident (constant index_map -> one DMA)
    # out_ref  : VMEM (TM, E)
    i = pl.program_id(0)
    tm, _ = out_ref.shape
    s_pad = pos_ref.shape[0]
    base = i * tm

    # Row gather: dynamic sublane slices out of the resident table.
    for j in range(tm):                                   # static unroll
        row = tok_ref[base + j]                           # scalar read (SMEM)
        out_ref[pl.ds(j, 1), :] = table_ref[pl.ds(row, 1), :].astype(out_ref.dtype)

    # Dense positional add: TM always divides S_pad, so the tile never
    # straddles a sequence boundary.
    pos_base = pl.multiple_of(base % s_pad, tm)
    out_ref[...] = out_ref[...] + pos_ref[pl.ds(pos_base, tm), :].astype(out_ref.dtype)


# ----------------------------------------------------------------------------
# Path B: HBM-resident table, per-row DMA gather.
# ----------------------------------------------------------------------------
def _hbm_gather_kernel(tok_ref, table_hbm, pos_ref, out_ref, row_buf, sems):
    # tok_ref  : SMEM (B*S_pad,) int32  scalar-prefetched, clamped token ids
    # table_hbm: HBM  (V, E)            raw ref (memory_space=pl.ANY), manual DMA
    # pos_ref  : VMEM (TM, E)           pos tile; index depends only on the outer
    #                                   grid axis -> not re-fetched across inner steps
    # out_ref  : VMEM (TM, E)
    # row_buf  : VMEM (TM, E)           gather landing buffer
    # sems     : DMA semaphores (TM,)
    s_blk = pl.program_id(0)
    b = pl.program_id(1)
    nsb = pl.num_programs(0)
    tm, _ = out_ref.shape
    base = (b * nsb + s_blk) * tm                         # first flattened row
    half = tm // 2

    def issue(h):
        cps = []
        for j in range(half):                             # static unroll
            r = h * half + j
            row = tok_ref[base + r]                       # scalar read before any .wait()
            cp = pltpu.make_async_copy(
                table_hbm.at[pl.ds(row, 1), :],
                row_buf.at[pl.ds(r, 1), :],
                sems.at[r],
            )
            cp.start()
            cps.append(cp)
        return cps

    # Issue both halves up-front; half 1's DMAs overlap half 0's add/store.
    cps0 = issue(0)
    cps1 = issue(1)

    for cp in cps0:
        cp.wait()
    out_ref[pl.ds(0, half), :] = (
        row_buf[pl.ds(0, half), :].astype(out_ref.dtype)
        + pos_ref[pl.ds(0, half), :].astype(out_ref.dtype))

    for cp in cps1:
        cp.wait()
    out_ref[pl.ds(half, half), :] = (
        row_buf[pl.ds(half, half), :].astype(out_ref.dtype)
        + pos_ref[pl.ds(half, half), :].astype(out_ref.dtype))


# ----------------------------------------------------------------------------
# Tiling / budget helpers (all static, derived from shapes).
# ----------------------------------------------------------------------------
def _pick_row_tile(s_pad, bytes_per_row, budget_bytes, cap):
    """Largest row tile (multiple of 8, <= cap) dividing s_pad within budget."""
    for tm in (512, 256, 128, 64, 32, 16, 8):
        if tm <= cap and s_pad % tm == 0 and tm * bytes_per_row <= budget_bytes:
            return tm
    return 8                                              # s_pad is a multiple of 8


def _vmem_limit(needed_bytes):
    return int(min(max(needed_bytes + 8 * _MIB, 32 * _MIB), 56 * _MIB))


# ----------------------------------------------------------------------------
# Forward pass.
# ----------------------------------------------------------------------------
@functools.partial(jax.jit, static_argnames=("force_hbm_gather",))
def gpt_embedding_forward(tokens, emb_table, position_encoding, *,
                          force_hbm_gather=False):
    """tokens: int [B, S] -> embeddings float32 [B, S, E]."""
    B, S = tokens.shape
    V, E = emb_table.shape
    isz = jnp.dtype(emb_table.dtype).itemsize
    out_dtype = jnp.float32

    # Pad S up to a multiple of 8 so every output block satisfies (8, 128).
    s_pad = ((S + 7) // 8) * 8
    if s_pad != S:
        tokens = jnp.pad(tokens, ((0, 0), (0, s_pad - S)))   # pad with id 0 (valid)
    n_rows = B * s_pad

    # Clamp ids (matches jnp.take clamping; nn.Embedding would raise on OOB).
    tok_flat = jnp.clip(tokens.reshape(n_rows).astype(jnp.int32), 0, V - 1)

    pos = position_encoding[:S, :].astype(emb_table.dtype)
    if s_pad != S:
        pos = jnp.concatenate(
            [pos, jnp.zeros((s_pad - S, E), pos.dtype)], axis=0)

    resident_footprint = 2 * (V * E + s_pad * E) * isz       # table + pos (double-buffered)
    use_resident = (not force_hbm_gather) and (resident_footprint <= _RESIDENT_TABLE_BUDGET)

    if use_resident:
        # -------- Path A: resident table --------
        tm = _pick_row_tile(s_pad, bytes_per_row=2 * E * 4,
                            budget_bytes=8 * _MIB, cap=256)
        needed = resident_footprint + 2 * tm * E * 4
        out_flat = pl.pallas_call(
            _resident_gather_kernel,
            out_shape=jax.ShapeDtypeStruct((n_rows, E), out_dtype),
            grid_spec=pltpu.PrefetchScalarGridSpec(
                num_scalar_prefetch=1,                         # tok_flat -> SMEM
                grid=(n_rows // tm,),
                in_specs=[
                    pl.BlockSpec((V, E), lambda i, tok: (0, 0)),      # table: resident
                    pl.BlockSpec((s_pad, E), lambda i, tok: (0, 0)),  # pos: resident
                ],
                out_specs=pl.BlockSpec((tm, E), lambda i, tok: (i, 0)),
            ),
            compiler_params=pltpu.CompilerParams(
                dimension_semantics=("parallel",),             # 2 TCs on v7x
                vmem_limit_bytes=_vmem_limit(needed),
            ),
        )(tok_flat, emb_table, pos)
    else:
        # -------- Path B: HBM row-gather --------
        # Per-row VMEM bytes: row_buf + 2x pos tile (double-buffered) + 2x out.
        per_row = E * (isz + 2 * isz + 2 * 4)
        tm = _pick_row_tile(s_pad, bytes_per_row=per_row,
                            budget_bytes=16 * _MIB, cap=128)
        blocks_per_seq = s_pad // tm
        needed = tm * per_row
        out_flat = pl.pallas_call(
            _hbm_gather_kernel,
            out_shape=jax.ShapeDtypeStruct((n_rows, E), out_dtype),
            grid_spec=pltpu.PrefetchScalarGridSpec(
                num_scalar_prefetch=1,                         # tok_flat -> SMEM
                grid=(blocks_per_seq, B),                      # B innermost: pos tile reused
                in_specs=[
                    pl.BlockSpec(memory_space=pl.ANY),         # table stays in HBM
                    pl.BlockSpec((tm, E), lambda s, b, tok: (s, 0)),
                ],
                out_specs=pl.BlockSpec(
                    (tm, E), lambda s, b, tok: (b * blocks_per_seq + s, 0)),
                scratch_shapes=[
                    pltpu.VMEM((tm, E), emb_table.dtype),      # gather landing buffer
                    pltpu.SemaphoreType.DMA((tm,)),            # one sem per in-flight row
                ],
            ),
            compiler_params=pltpu.CompilerParams(
                dimension_semantics=("arbitrary", "parallel"),
                vmem_limit_bytes=_vmem_limit(needed),
            ),
        )(tok_flat, emb_table, pos)

    out = out_flat.reshape(B, s_pad, E)
    if s_pad != S:
        out = out[:, :S, :]
    return out


# ----------------------------------------------------------------------------
# Demo / self-check.
# ----------------------------------------------------------------------------
if __name__ == "__main__":
    vocabulary_size = 64
    embedding_size = 128
    n_max_positions = 32
    batch_size = 2
    sequence_length = 16
    padding_index = None

    key = jax.random.PRNGKey(0)
    k_w, k_tok = jax.random.split(key)

    emb_table, pos_enc = init_gpt_embedding_params(
        k_w, vocabulary_size, embedding_size, n_max_positions, padding_index)

    tokens = jax.random.randint(
        k_tok, (batch_size, sequence_length), 0, vocabulary_size, dtype=jnp.int32)

    # Pure-JAX reference (gather + broadcast add).
    ref = jnp.take(emb_table, tokens, axis=0) + pos_enc[None, :sequence_length, :]

    # Path A: VMEM-resident table (default for these shapes).
    out_a = jax.block_until_ready(gpt_embedding_forward(tokens, emb_table, pos_enc))
    assert out_a.shape == (batch_size, sequence_length, embedding_size)
    assert jnp.allclose(out_a, ref, atol=1e-6, rtol=1e-6)

    # Path B: HBM-gather fallback (forced, to validate the large-vocab path).
    out_b = jax.block_until_ready(
        gpt_embedding_forward(tokens, emb_table, pos_enc, force_hbm_gather=True))
    assert out_b.shape == (batch_size, sequence_length, embedding_size)
    assert jnp.allclose(out_b, ref, atol=1e-6, rtol=1e-6)

    print("KERNEL_OK")
</pallas_src>

<mosaic_0001>
module attributes {stable_mosaic.version = 11 : i64} {
  func.func @_resident_gather_kernel(%arg0: i32, %arg1: memref<32xi32, #tpu.memory_space<smem>>, %arg2: memref<64x128xf32, #tpu.memory_space<vmem>>, %arg3: memref<16x128xf32, #tpu.memory_space<vmem>>, %arg4: memref<16x128xf32, #tpu.memory_space<vmem>>) attributes {dimension_semantics = [#tpu.dimension_semantics<parallel>], iteration_bounds = array<i64: 2>, scalar_prefetch = 1 : i64, scratch_operands = 0 : i64, tpu.core_type = #tpu.core_type<tc>, window_params = [{pipeline_mode = #tpu.pipeline_mode<synchronous>, transform_indices = @transform_0, window_bounds = array<i64: 64, 128>}, {pipeline_mode = #tpu.pipeline_mode<synchronous>, transform_indices = @transform_1, window_bounds = array<i64: 16, 128>}, {transform_indices = @transform_2, window_bounds = array<i64: 16, 128>}]} {
    %c16_i32 = arith.constant 16 : i32
    %0 = arith.muli %arg0, %c16_i32 : i32
    %c0_i32 = arith.constant 0 : i32
    %1 = arith.addi %0, %c0_i32 : i32
    %2 = arith.index_cast %1 : i32 to index
    %3 = memref.load %arg1[%2] : memref<32xi32, #tpu.memory_space<smem>>
    %4 = arith.index_cast %3 : i32 to index
    %c0 = arith.constant 0 : index
    %5 = vector.load %arg2[%4, %c0] : memref<64x128xf32, #tpu.memory_space<vmem>>, vector<1x128xf32>
    %c0_0 = arith.constant 0 : index
    %c0_1 = arith.constant 0 : index
    %6 = vector.load %arg4[%c0_0, %c0_1] : memref<16x128xf32, #tpu.memory_space<vmem>>, vector<1x128xf32>
    tpu.vector_store %arg4[%c0_0, %c0_1], %5 {strides = array<i32>} : memref<16x128xf32, #tpu.memory_space<vmem>>, vector<1x128xf32>,
    %c1_i32 = arith.constant 1 : i32
    %7 = arith.addi %0, %c1_i32 : i32
    %8 = arith.index_cast %7 : i32 to index
    %9 = memref.load %arg1[%8] : memref<32xi32, #tpu.memory_space<smem>>
    %10 = arith.index_cast %9 : i32 to index
    %c0_2 = arith.constant 0 : index
    %11 = vector.load %arg2[%10, %c0_2] : memref<64x128xf32, #tpu.memory_space<vmem>>, vector<1x128xf32>
    %c1 = arith.constant 1 : index
    %c0_3 = arith.constant 0 : index
    %12 = vector.load %arg4[%c1, %c0_3] : memref<16x128xf32, #tpu.memory_space<vmem>>, vector<1x128xf32>
    tpu.vector_store %arg4[%c1, %c0_3], %11 {strides = array<i32>} : memref<16x128xf32, #tpu.memory_space<vmem>>, vector<1x128xf32>,
    %c2_i32 = arith.constant 2 : i32
    %13 = arith.addi %0, %c2_i32 : i32
    %14 = arith.index_cast %13 : i32 to index
    %15 = memref.load %arg1[%14] : memref<32xi32, #tpu.memory_space<smem>>
    %16 = arith.index_cast %15 : i32 to index
    %c0_4 = arith.constant 0 : index
    %17 = vector.load %arg2[%16, %c0_4] : memref<64x128xf32, #tpu.memory_space<vmem>>, vector<1x128xf32>
    %c2 = arith.constant 2 : index
    %c0_5 = arith.constant 0 : index
    %18 = vector.load %arg4[%c2, %c0_5] : memref<16x128xf32, #tpu.memory_space<vmem>>, vector<1x128xf32>
    tpu.vector_store %arg4[%c2, %c0_5], %17 {strides = array<i32>} : memref<16x128xf32, #tpu.memory_space<vmem>>, vector<1x128xf32>,
    %c3_i32 = arith.constant 3 : i32
    %19 = arith.addi %0, %c3_i32 : i32
    %20 = arith.index_cast %19 : i32 to index
    %21 = memref.load %arg1[%20] : memref<32xi32, #tpu.memory_space<smem>>
    %22 = arith.index_cast %21 : i32 to index
    %c0_6 = arith.constant 0 : index
    %23 = vector.load %arg2[%22, %c0_6] : memref<64x128xf32, #tpu.memory_space<vmem>>, vector<1x128xf32>
    %c3 = arith.constant 3 : index
    %c0_7 = arith.constant 0 : index
    %24 = vector.load %arg4[%c3, %c0_7] : memref<16x128xf32, #tpu.memory_space<vmem>>, vector<1x128xf32>
    tpu.vector_store %arg4[%c3, %c0_7], %23 {strides = array<i32>} : memref<16x128xf32, #tpu.memory_space<vmem>>, vector<1x128xf32>,
    %c4_i32 = arith.constant 4 : i32
    %25 = arith.addi %0, %c4_i32 : i32
    %26 = arith.index_cast %25 : i32 to index
    %27 = memref.load %arg1[%26] : memref<32xi32, #tpu.memory_space<smem>>
    %28 = arith.index_cast %27 : i32 to index
    %c0_8 = arith.constant 0 : index
    %29 = vector.load %arg2[%28, %c0_8] : memref<64x128xf32, #tpu.memory_space<vmem>>, vector<1x128xf32>
    %c4 = arith.constant 4 : index
    %c0_9 = arith.constant 0 : index
    %30 = vector.load %arg4[%c4, %c0_9] : memref<16x128xf32, #tpu.memory_space<vmem>>, vector<1x128xf32>
    tpu.vector_store %arg4[%c4, %c0_9], %29 {strides = array<i32>} : memref<16x128xf32, #tpu.memory_space<vmem>>, vector<1x128xf32>,
    %c5_i32 = arith.constant 5 : i32
    %31 = arith.addi %0, %c5_i32 : i32
    %32 = arith.index_cast %31 : i32 to index
    %33 = memref.load %arg1[%32] : memref<32xi32, #tpu.memory_space<smem>>
    %34 = arith.index_cast %33 : i32 to index
    %c0_10 = arith.constant 0 : index
    %35 = vector.load %arg2[%34, %c0_10] : memref<64x128xf32, #tpu.memory_space<vmem>>, vector<1x128xf32>
    %c5 = arith.constant 5 : index
    %c0_11 = arith.constant 0 : index
    %36 = vector.load %arg4[%c5, %c0_11] : memref<16x128xf32, #tpu.memory_space<vmem>>, vector<1x128xf32>
    tpu.vector_store %arg4[%c5, %c0_11], %35 {strides = array<i32>} : memref<16x128xf32, #tpu.memory_space<vmem>>, vector<1x128xf32>,
    %c6_i32 = arith.constant 6 : i32
    %37 = arith.addi %0, %c6_i32 : i32
    %38 = arith.index_cast %37 : i32 to index
    %39 = memref.load %arg1[%38] : memref<32xi32, #tpu.memory_space<smem>>
    %40 = arith.index_cast %39 : i32 to index
    %c0_12 = arith.constant 0 : index
    %41 = vector.load %arg2[%40, %c0_12] : memref<64x128xf32, #tpu.memory_space<vmem>>, vector<1x128xf32>
    %c6 = arith.constant 6 : index
    %c0_13 = arith.constant 0 : index
    %42 = vector.load %arg4[%c6, %c0_13] : memref<16x128xf32, #tpu.memory_space<vmem>>, vector<1x128xf32>
    tpu.vector_store %arg4[%c6, %c0_13], %41 {strides = array<i32>} : memref<16x128xf32, #tpu.memory_space<vmem>>, vector<1x128xf32>,
    %c7_i32 = arith.constant 7 : i32
    %43 = arith.addi %0, %c7_i32 : i32
    %44 = arith.index_cast %43 : i32 to index
    %45 = memref.load %arg1[%44] : memref<32xi32, #tpu.memory_space<smem>>
    %46 = arith.index_cast %45 : i32 to index
    %c0_14 = arith.constant 0 : index
    %47 = vector.load %arg2[%46, %c0_14] : memref<64x128xf32, #tpu.memory_space<vmem>>, vector<1x128xf32>
    %c7 = arith.constant 7 : index
    %c0_15 = arith.constant 0 : index
    %48 = vector.load %arg4[%c7, %c0_15] : memref<16x128xf32, #tpu.memory_space<vmem>>, vector<1x128xf32>
    tpu.vector_store %arg4[%c7, %c0_15], %47 {strides = array<i32>} : memref<16x128xf32, #tpu.memory_space<vmem>>, vector<1x128xf32>,
    %c8_i32 = arith.constant 8 : i32
    %49 = arith.addi %0, %c8_i32 : i32
    %50 = arith.index_cast %49 : i32 to index
    %51 = memref.load %arg1[%50] : memref<32xi32, #tpu.memory_space<smem>>
    %52 = arith.index_cast %51 : i32 to index
    %c0_16 = arith.constant 0 : index
    %53 = vector.load %arg2[%52, %c0_16] : memref<64x128xf32, #tpu.memory_space<vmem>>, vector<1x128xf32>
    %c8 = arith.constant 8 : index
    %c0_17 = arith.constant 0 : index
    %54 = vector.load %arg4[%c8, %c0_17] : memref<16x128xf32, #tpu.memory_space<vmem>>, vector<1x128xf32>
    tpu.vector_store %arg4[%c8, %c0_17], %53 {strides = array<i32>} : memref<16x128xf32, #tpu.memory_space<vmem>>, vector<1x128xf32>,
    %c9_i32 = arith.constant 9 : i32
    %55 = arith.addi %0, %c9_i32 : i32
    %56 = arith.index_cast %55 : i32 to index
    %57 = memref.load %arg1[%56] : memref<32xi32, #tpu.memory_space<smem>>
    %58 = arith.index_cast %57 : i32 to index
    %c0_18 = arith.constant 0 : index
    %59 = vector.load %arg2[%58, %c0_18] : memref<64x128xf32, #tpu.memory_space<vmem>>, vector<1x128xf32>
    %c9 = arith.constant 9 : index
    %c0_19 = arith.constant 0 : index
    %60 = vector.load %arg4[%c9, %c0_19] : memref<16x128xf32, #tpu.memory_space<vmem>>, vector<1x128xf32>
    tpu.vector_store %arg4[%c9, %c0_19], %59 {strides = array<i32>} : memref<16x128xf32, #tpu.memory_space<vmem>>, vector<1x128xf32>,
    %c10_i32 = arith.constant 10 : i32
    %61 = arith.addi %0, %c10_i32 : i32
    %62 = arith.index_cast %61 : i32 to index
    %63 = memref.load %arg1[%62] : memref<32xi32, #tpu.memory_space<smem>>
    %64 = arith.index_cast %63 : i32 to index
    %c0_20 = arith.constant 0 : index
    %65 = vector.load %arg2[%64, %c0_20] : memref<64x128xf32, #tpu.memory_space<vmem>>, vector<1x128xf32>
    %c10 = arith.constant 10 : index
    %c0_21 = arith.constant 0 : index
    %66 = vector.load %arg4[%c10, %c0_21] : memref<16x128xf32, #tpu.memory_space<vmem>>, vector<1x128xf32>
    tpu.vector_store %arg4[%c10, %c0_21], %65 {strides = array<i32>} : memref<16x128xf32, #tpu.memory_space<vmem>>, vector<1x128xf32>,
    %c11_i32 = arith.constant 11 : i32
    %67 = arith.addi %0, %c11_i32 : i32
    %68 = arith.index_cast %67 : i32 to index
    %69 = memref.load %arg1[%68] : memref<32xi32, #tpu.memory_space<smem>>
    %70 = arith.index_cast %69 : i32 to index
    %c0_22 = arith.constant 0 : index
    %71 = vector.load %arg2[%70, %c0_22] : memref<64x128xf32, #tpu.memory_space<vmem>>, vector<1x128xf32>
    %c11 = arith.constant 11 : index
    %c0_23 = arith.constant 0 : index
    %72 = vector.load %arg4[%c11, %c0_23] : memref<16x128xf32, #tpu.memory_space<vmem>>, vector<1x128xf32>
    tpu.vector_store %arg4[%c11, %c0_23], %71 {strides = array<i32>} : memref<16x128xf32, #tpu.memory_space<vmem>>, vector<1x128xf32>,
    %c12_i32 = arith.constant 12 : i32
    %73 = arith.addi %0, %c12_i32 : i32
    %74 = arith.index_cast %73 : i32 to index
    %75 = memref.load %arg1[%74] : memref<32xi32, #tpu.memory_space<smem>>
    %76 = arith.index_cast %75 : i32 to index
    %c0_24 = arith.constant 0 : index
    %77 = vector.load %arg2[%76, %c0_24] : memref<64x128xf32, #tpu.memory_space<vmem>>, vector<1x128xf32>
    %c12 = arith.constant 12 : index
    %c0_25 = arith.constant 0 : index
    %78 = vector.load %arg4[%c12, %c0_25] : memref<16x128xf32, #tpu.memory_space<vmem>>, vector<1x128xf32>
    tpu.vector_store %arg4[%c12, %c0_25], %77 {strides = array<i32>} : memref<16x128xf32, #tpu.memory_space<vmem>>, vector<1x128xf32>,
    %c13_i32 = arith.constant 13 : i32
    %79 = arith.addi %0, %c13_i32 : i32
    %80 = arith.index_cast %79 : i32 to index
    %81 = memref.load %arg1[%80] : memref<32xi32, #tpu.memory_space<smem>>
    %82 = arith.index_cast %81 : i32 to index
    %c0_26 = arith.constant 0 : index
    %83 = vector.load %arg2[%82, %c0_26] : memref<64x128xf32, #tpu.memory_space<vmem>>, vector<1x128xf32>
    %c13 = arith.constant 13 : index
    %c0_27 = arith.constant 0 : index
    %84 = vector.load %arg4[%c13, %c0_27] : memref<16x128xf32, #tpu.memory_space<vmem>>, vector<1x128xf32>
    tpu.vector_store %arg4[%c13, %c0_27], %83 {strides = array<i32>} : memref<16x128xf32, #tpu.memory_space<vmem>>, vector<1x128xf32>,
    %c14_i32 = arith.constant 14 : i32
    %85 = arith.addi %0, %c14_i32 : i32
    %86 = arith.index_cast %85 : i32 to index
    %87 = memref.load %arg1[%86] : memref<32xi32, #tpu.memory_space<smem>>
    %88 = arith.index_cast %87 : i32 to index
    %c0_28 = arith.constant 0 : index
    %89 = vector.load %arg2[%88, %c0_28] : memref<64x128xf32, #tpu.memory_space<vmem>>, vector<1x128xf32>
    %c14 = arith.constant 14 : index
    %c0_29 = arith.constant 0 : index
    %90 = vector.load %arg4[%c14, %c0_29] : memref<16x128xf32, #tpu.memory_space<vmem>>, vector<1x128xf32>
    tpu.vector_store %arg4[%c14, %c0_29], %89 {strides = array<i32>} : memref<16x128xf32, #tpu.memory_space<vmem>>, vector<1x128xf32>,
    %c15_i32 = arith.constant 15 : i32
    %91 = arith.addi %0, %c15_i32 : i32
    %92 = arith.index_cast %91 : i32 to index
    %93 = memref.load %arg1[%92] : memref<32xi32, #tpu.memory_space<smem>>
    %94 = arith.index_cast %93 : i32 to index
    %c0_30 = arith.constant 0 : index
    %95 = vector.load %arg2[%94, %c0_30] : memref<64x128xf32, #tpu.memory_space<vmem>>, vector<1x128xf32>
    %c15 = arith.constant 15 : index
    %c0_31 = arith.constant 0 : index
    %96 = vector.load %arg4[%c15, %c0_31] : memref<16x128xf32, #tpu.memory_space<vmem>>, vector<1x128xf32>
    tpu.vector_store %arg4[%c15, %c0_31], %95 {strides = array<i32>} : memref<16x128xf32, #tpu.memory_space<vmem>>, vector<1x128xf32>,
    %c16_i32_32 = arith.constant 16 : i32
    %c0_i32_33 = arith.constant 0 : i32
    %97 = arith.cmpi eq, %c16_i32_32, %c0_i32_33 : i32
    %c1_i32_34 = arith.constant 1 : i32
    %98 = arith.select %97, %c1_i32_34, %c16_i32_32 : i32
    %99 = arith.remsi %0, %98 : i32
    %c0_i32_35 = arith.constant 0 : i32
    %100 = arith.cmpi ne, %99, %c0_i32_35 : i32
    %c0_i32_36 = arith.constant 0 : i32
    %101 = arith.cmpi slt, %99, %c0_i32_36 : i32
    %c0_i32_37 = arith.constant 0 : i32
    %102 = arith.cmpi slt, %98, %c0_i32_37 : i32
    %103 = arith.xori %101, %102 : i1
    %104 = arith.andi %103, %100 : i1
    %105 = arith.addi %99, %98 : i32
    %106 = arith.select %104, %105, %99 : i32
    %107 = tpu.assume_multiple %106, 16 : i32
    %c0_38 = arith.constant 0 : index
    %c0_39 = arith.constant 0 : index
    %108 = vector.load %arg4[%c0_38, %c0_39] : memref<16x128xf32, #tpu.memory_space<vmem>>, vector<16x128xf32>
    %109 = arith.index_cast %107 : i32 to index
    %c0_40 = arith.constant 0 : index
    %110 = vector.load %arg3[%109, %c0_40] : memref<16x128xf32, #tpu.memory_space<vmem>>, vector<16x128xf32>
    %111 = arith.addf %108, %110 : vector<16x128xf32>
    %c0_41 = arith.constant 0 : index
    %c0_42 = arith.constant 0 : index
    %112 = vector.load %arg4[%c0_41, %c0_42] : memref<16x128xf32, #tpu.memory_space<vmem>>, vector<16x128xf32>
    tpu.vector_store %arg4[%c0_41, %c0_42], %111 {strides = array<i32>} : memref<16x128xf32, #tpu.memory_space<vmem>>, vector<16x128xf32>,
    return
  }
  func.func @transform_0(%arg0: i32, %arg1: memref<32xi32, #tpu.memory_space<smem>>) -> (i32, i32) {
    %c0_i32 = arith.constant 0 : i32
    %c0_i32_0 = arith.constant 0 : i32
    %c0_i32_1 = arith.constant 0 : i32
    return %c0_i32, %c0_i32_0 : i32, i32
  }
  func.func @transform_1(%arg0: i32, %arg1: memref<32xi32, #tpu.memory_space<smem>>) -> (i32, i32) {
    %c0_i32 = arith.constant 0 : i32
    %c0_i32_0 = arith.constant 0 : i32
    %c0_i32_1 = arith.constant 0 : i32
    return %c0_i32, %c0_i32_0 : i32, i32
  }
  func.func @transform_2(%arg0: i32, %arg1: memref<32xi32, #tpu.memory_space<smem>>) -> (i32, i32) {
    %c0_i32 = arith.constant 0 : i32
    %c0_i32_0 = arith.constant 0 : i32
    return %arg0, %c0_i32 : i32, i32
  }
}

</mosaic_0001>

<llo_original>
// kernel: gpt_embedding_forward.1
$region0: #{gpt_embedding_forward.1}
  #allocation0 [shape = 'u32[]', space=smem, size = 0x4, offset = 0x4, fixed_abs, tag = 'smem constant byte address 0x4 - core index']
  #allocation1 [shape = 'u32[144,128]{1,0:T(1,128)}', space=vmem, size = 0x12000, scoped, tag = 'internal scratch']
  #allocation2 [shape = 's32[1]{0}', space=sflag, size = 0x4, scoped, tag = 'scoped memory for gpt_embedding_forward.1']
  #allocation3 [shape = 'u8[512]{0}', space=smem, size = 0x200, scoped, tag = 'prefetched SMEM operand 0']
  %s0 = inlined_call_operand.vmem [shape: s32[32], index: 0, kind: input, shape index: {}]
  %s1 = inlined_call_operand.hbm [shape: f32[64,128], index: 1, kind: input, shape index: {}]
  %s2 = inlined_call_operand.vmem [shape: f32[16,128], index: 2, kind: input, shape index: {}]
  %s3 = inlined_call_operand.hbm [shape: f32[32,128], index: 3, kind: output, shape index: {}]
  %s4 = sld [smem:[#allocation0]]
  $region45: #{gpt_embedding_forward.1} parent=0
    _
  %s6 = ssub.s32 1, %s4
  %s7 = scalar_select 0, %s6, %s4
  %s8 = sshll.u32 %s0, 4
  %s9 = int_to_ptr.vmem [resolvable:$true] %s8
  %11 = dma.vmem_to_smem %s9, 16, [#allocation3], [#allocation2]
  %12 = dma.done [#allocation2], 16
  %13 = sfence
  $region1: #{gpt_embedding_forward.1} parent=0
    #allocation4 [shape = 'u8[32768]{0}', space=vmem, size = 0x8000, scoped, tag = 'input window, operand 1, single buffered']
    #allocation5 [shape = 's32[2]{0}', space=sflag, size = 0x8, scoped, tag = 'scoped memory for gpt_embedding_forward.1']
    #allocation6 [shape = 's32[2]{0}', space=sflag, size = 0x8, scoped, tag = 'scoped memory for gpt_embedding_forward.1']
    #allocation7 [shape = 'u8[16384]{0}', space=vmem, size = 0x4000, scoped, tag = 'output window, operand 0']
    %14 = vsyncpa [#allocation5], 0
    %15 = vsyncpa [#allocation6], 0
    %s16 = scalar_lea.sflag [#allocation6], 1
    %17 = vsyncpa %s16, 0
    loop: start=0, step=1, limit=4
    $region2: #{gpt_embedding_forward.1} parent=1 // loop_pre_header
      _
    $region3: #{gpt_embedding_forward.1} parent=1 // loop_header
      %s19 = sphi 0, %s23
      %p20 = scmp.ge.s32.totalorder %s19, 4
      %s27 = sphi 0, %s27
      %s29 = sphi 0, %s27
      %s30 = sphi 0, %s29
      %s44 = sphi 0, %s30
      %s48 = sphi 0, %s48
      %s50 = sphi 0, %s48
      %s51 = sphi 0, %s50
      %s65 = sphi 0, %s51
      %s71 = sphi 0, %s73
      %s74 = sphi 0, %s71
      %s75 = sphi 0, %s74
      %s91 = sphi 0, %s75
    $region4: #{gpt_embedding_forward.1} parent=1 // loop_header_branch
      %22 = sbr.rel (%p20) target = $region8
    $region5: #{gpt_embedding_forward.1} parent=1 // loop_body
      %s24 = ssub.s32 %s19, 1
      %s25 = ssub.s32 %s19, 2
      %s26 = sadd.s32 %s19, 1
      %s28 = sadd.s32 %s27, 1
      %p31 = scmp.eq.s32.totalorder %s19, 1
      %p32 = scmp.ne.s32.totalorder %s27, %s29
      %p33 = scmp.eq.s32.totalorder %s19, 0
      %p34 = por %p32, %p33
      %p35 = scmp.ne.s32.totalorder %s27, %s29
      %p36 = scmp.eq.s32.totalorder %s24, 1
      %p37 = por %p35, %p36
      %p38 = scmp.ne.s32.totalorder %s29, %s30
      %p39 = scmp.eq.s32.totalorder %s24, 0
      %p40 = por %p38, %p39
      %p41 = scmp.ne.s32.totalorder %s29, %s30
      %p42 = scmp.eq.s32.totalorder %s25, 1
      %p43 = por %p41, %p42
      %p45 = scmp.ne.s32.totalorder %s30, %s44
      %p46 = scmp.eq.s32.totalorder %s25, 0
      %p47 = por %p45, %p46
      %s49 = sadd.s32 %s48, 1
      %p52 = scmp.eq.s32.totalorder %s19, 1
      %p53 = scmp.ne.s32.totalorder %s48, %s50
      %p54 = scmp.eq.s32.totalorder %s19, 0
      %p55 = por %p53, %p54
      %p56 = scmp.ne.s32.totalorder %s48, %s50
      %p57 = scmp.eq.s32.totalorder %s24, 1
      %p58 = por %p56, %p57
      %p59 = scmp.ne.s32.totalorder %s50, %s51
      %p60 = scmp.eq.s32.totalorder %s24, 0
      %p61 = por %p59, %p60
      %p62 = scmp.ne.s32.totalorder %s50, %s51
      %p63 = scmp.eq.s32.totalorder %s25, 1
      %p64 = por %p62, %p63
      %p66 = scmp.ne.s32.totalorder %s51, %s65
      %p67 = scmp.eq.s32.totalorder %s25, 0
      %p68 = por %p66, %p67
      %s69 = ssub.s32 %s19, %s26
      %p70 = scmp.eq.s32.totalorder %s69, 0
      %s72 = sadd.s32 %s71, 1
      %s73 = scalar_select %p70, %s71, %s72
      %p76 = pneg %p70
      %p77 = scmp.eq.s32.totalorder %s19, 1
      %p78 = por %p76, %p77
      %p79 = scmp.ne.s32.totalorder %s71, %s74
      %p80 = scmp.eq.s32.totalorder %s19, 0
      %p81 = por %p79, %p80
      %p82 = scmp.ne.s32.totalorder %s71, %s74
      %p83 = scmp.eq.s32.totalorder %s24, 1
      %p84 = por %p82, %p83
      %p85 = scmp.ne.s32.totalorder %s74, %s75
      %p86 = scmp.eq.s32.totalorder %s24, 0
      %p87 = por %p85, %p86
      %p88 = scmp.ne.s32.totalorder %s74, %s75
      %p89 = scmp.eq.s32.totalorder %s25, 1
      %p90 = por %p88, %p89
      %p92 = scmp.ne.s32.totalorder %s75, %s91
      %p93 = scmp.eq.s32.totalorder %s25, 0
      %p94 = por %p92, %p93
      %p95 = scmp.le.s32.totalorder 1, %s19
      %p96 = scmp.lt.s32.totalorder %s19, 3
      %p97 = pnand %p95, %p96
      %p98 = pneg %p97
      // Predicated region
      $region9: #{gpt_embedding_forward.1} parent=5 // pred_check
        _
      $region10: #{gpt_embedding_forward.1} parent=5 // pred_check_branch
        %100 = sbr.rel (%p97) target = $region12
      $region11: #{gpt_embedding_forward.1} parent=5 // pred_region
        %s101 = ssub.s32 %s19, 1
        // Predicated region
        $region13: #{gpt_embedding_forward.1} parent=11 // pred_check
          %p102 = pneg %p40
        $region14: #{gpt_embedding_forward.1} parent=11 // pred_check_branch
          %104 = sbr.rel (%p102) target = $region16
        $region15: #{gpt_embedding_forward.1} parent=11 // pred_region
          %s106 = ssub.s32 1024, 1024
          %107 = vsyncadd [#allocation5], %s106
          %s108 = sshll.u32 [#allocation4], 4
          %s109 = int_to_ptr.vmem [resolvable:$true] %s108
          %114 = dma.hbm_to_vmem [thread:$0]  %s1, 1024, %s109, [#allocation5], 128, 128, 8
        $region16: #{gpt_embedding_forward.1} parent=11 // pred_fallthru
          _
        // Predicated region
        $region17: #{gpt_embedding_forward.1} parent=11 // pred_check
          %p115 = pneg %p61
        $region18: #{gpt_embedding_forward.1} parent=11 // pred_check_branch
          %117 = sbr.rel (%p115) target = $region20
        $region19: #{gpt_embedding_forward.1} parent=11 // pred_region
          _
        $region20: #{gpt_embedding_forward.1} parent=11 // pred_fallthru
          _
      $region12: #{gpt_embedding_forward.1} parent=5 // pred_fallthru
        _
      %p118 = scmp.lt.s32.totalorder %s19, 2
      // Predicated region
      $region21: #{gpt_embedding_forward.1} parent=5 // pred_check
        %p119 = pneg %p118
      $region22: #{gpt_embedding_forward.1} parent=5 // pred_check_branch
        %121 = sbr.rel (%p119) target = $region24
      $region23: #{gpt_embedding_forward.1} parent=5 // pred_region
        _
      $region24: #{gpt_embedding_forward.1} parent=5 // pred_fallthru
        _
      %p122 = scmp.le.s32.totalorder 1, %s19
      %p123 = scmp.lt.s32.totalorder %s19, 3
      %p124 = pnand %p122, %p123
      %p125 = pneg %p124
      // Predicated region
      $region25: #{gpt_embedding_forward.1} parent=5 // pred_check
        _
      $region26: #{gpt_embedding_forward.1} parent=5 // pred_check_branch
        %127 = sbr.rel (%p124) target = $region28
      $region27: #{gpt_embedding_forward.1} parent=5 // pred_region
        %s128 = ssub.s32 %s19, 1
        // Predicated region
        $region29: #{gpt_embedding_forward.1} parent=27 // pred_check
          %p129 = pneg %p40
        $region30: #{gpt_embedding_forward.1} parent=27 // pred_check_branch
          %131 = sbr.rel (%p129) target = $region32
        $region31: #{gpt_embedding_forward.1} parent=27 // pred_region
          %132 = dma.done [#allocation5], 1024
        $region32: #{gpt_embedding_forward.1} parent=27 // pred_fallthru
          _
        %p133 = pneg %p40
        %p134 = pneg %p37
        %p135 = pneg %p61
        %p136 = pneg %p58
        %p137 = pneg %p87
        %p138 = pneg %p84
        %s139 = sand.u32 %s74, 1
        %s140 = scalar_lea.sflag [#allocation6], %s139
        %s141 = sand.u32 %s74, 1
        %s142 = smul.addr %s141, 16
        %s143 = scalar_lea.vmem [#allocation7], %s142
        %s144 = smul.u32 2, %s24
        %s145 = smul.u32 %s24, 16
        %s146 = sld [smem:[#allocation3 + %s145]]
        %s147 = scalar_lea.vmem [#allocation4], %s146
        %v148 = vld [vmem:[%s147] sm:$0x1]
        %149 = vst [vmem:[%s143] sm:$0x1] %v148
        %s150 = sadd.s32 %s145, 1
        %s151 = sld [smem:[#allocation3 + %s150]]
        %s152 = scalar_lea.vmem [#allocation4], %s151
        %v153 = vld [vmem:[%s152] sm:$0x1]
        %154 = vst [vmem:[%s143 + $0x1] sm:$0x1] %v153
        %s155 = sadd.s32 %s145, 2
        %s156 = sld [smem:[#allocation3 + %s155]]
        %s157 = scalar_lea.vmem [#allocation4], %s156
        %v158 = vld [vmem:[%s157] sm:$0x1]
        %159 = vst [vmem:[%s143 + $0x2] sm:$0x1] %v158
        %s160 = sadd.s32 %s145, 3
        %s161 = sld [smem:[#allocation3 + %s160]]
        %s162 = scalar_lea.vmem [#allocation4], %s161
        %v163 = vld [vmem:[%s162] sm:$0x1]
        %164 = vst [vmem:[%s143 + $0x3] sm:$0x1] %v163
        %s165 = sadd.s32 %s145, 4
        %s166 = sld [smem:[#allocation3 + %s165]]
        %s167 = scalar_lea.vmem [#allocation4], %s166
        %v168 = vld [vmem:[%s167] sm:$0x1]
        %169 = vst [vmem:[%s143 + $0x4] sm:$0x1] %v168
        %s170 = sadd.s32 %s145, 5
        %s171 = sld [smem:[#allocation3 + %s170]]
        %s172 = scalar_lea.vmem [#allocation4], %s171
        %v173 = vld [vmem:[%s172] sm:$0x1]
        %174 = vst [vmem:[%s143 + $0x5] sm:$0x1] %v173
        %s175 = sadd.s32 %s145, 6
        %s176 = sld [smem:[#allocation3 + %s175]]
        %s177 = scalar_lea.vmem [#allocation4], %s176
        %v178 = vld [vmem:[%s177] sm:$0x1]
        %179 = vst [vmem:[%s143 + $0x6] sm:$0x1] %v178
        %s180 = sadd.s32 %s145, 7
        %s181 = sld [smem:[#allocation3 + %s180]]
        %s182 = scalar_lea.vmem [#allocation4], %s181
        %v183 = vld [vmem:[%s182] sm:$0x1]
        %184 = vst [vmem:[%s143 + $0x7] sm:$0x1] %v183
        %s185 = sadd.s32 %s145, 8
        %s186 = sld [smem:[#allocation3 + %s185]]
        %s187 = scalar_lea.vmem [#allocation4], %s186
        %v188 = vld [vmem:[%s187] sm:$0x1]
        %189 = vst [vmem:[%s143 + $0x8] sm:$0x1] %v188
        %s190 = sadd.s32 %s145, 9
        %s191 = sld [smem:[#allocation3 + %s190]]
        %s192 = scalar_lea.vmem [#allocation4], %s191
        %v193 = vld [vmem:[%s192] sm:$0x1]
        %194 = vst [vmem:[%s143 + $0x9] sm:$0x1] %v193
        %s195 = sadd.s32 %s145, 10
        %s196 = sld [smem:[#allocation3 + %s195]]
        %s197 = scalar_lea.vmem [#allocation4], %s196
        %v198 = vld [vmem:[%s197] sm:$0x1]
        %199 = vst [vmem:[%s143 + $0xa] sm:$0x1] %v198
        %s200 = sadd.s32 %s145, 11
        %s201 = sld [smem:[#allocation3 + %s200]]
        %s202 = scalar_lea.vmem [#allocation4], %s201
        %v203 = vld [vmem:[%s202] sm:$0x1]
        %204 = vst [vmem:[%s143 + $0xb] sm:$0x1] %v203
        %s205 = sadd.s32 %s145, 12
        %s206 = sld [smem:[#allocation3 + %s205]]
        %s207 = scalar_lea.vmem [#allocation4], %s206
        %v208 = vld [vmem:[%s207] sm:$0x1]
        %209 = vst [vmem:[%s143 + $0xc] sm:$0x1] %v208
        %s210 = sadd.s32 %s145, 13
        %s211 = sld [smem:[#allocation3 + %s210]]
        %s212 = scalar_lea.vmem [#allocation4], %s211
        %v213 = vld [vmem:[%s212] sm:$0x1]
        %214 = vst [vmem:[%s143 + $0xd] sm:$0x1] %v213
        %s215 = sadd.s32 %s145, 14
        %s216 = sld [smem:[#allocation3 + %s215]]
        %s217 = scalar_lea.vmem [#allocation4], %s216
        %v218 = vld [vmem:[%s217] sm:$0x1]
        %219 = vst [vmem:[%s143 + $0xe] sm:$0x1] %v218
        %s220 = sadd.s32 %s145, 15
        %s221 = sld [smem:[#allocation3 + %s220]]
        %s222 = scalar_lea.vmem [#allocation4], %s221
        %v223 = vld [vmem:[%s222] sm:$0x1]
        %224 = vst [vmem:[%s143 + $0xf] sm:$0x1] %v223
        %p225 = scmp.lt.s32.totalorder %s145, 0
        %s226 = ssub.s32 0, %s145
        %s227 = scalar_select %p225, %s226, %s145
        %s228 = sand.u32 %s227, 15
        %s229 = ssub.s32 0, %s228
        %s230 = scalar_select %p225, %s229, %s228
        %p231 = scmp.ne.s32.totalorder %s230, 0
        %p232 = scmp.lt.s32.totalorder %s230, 0
        %p233 = pnand %p232, %p231
        %p234 = pneg %p233
        %s235 = sadd.s32 %s230, 16
        %s236 = scalar_select %p234, %s235, %s230
        %v237 = vld [vmem:[%s143] sm:$0xff]
        %v238 = vld [vmem:[%s143 + $0x8] sm:$0xff]
        %s239 = scalar_lea.vmem %s2, %s236
        %v240 = vld [vmem:[%s239] sm:$0xff]
        %v241 = vld [vmem:[%s239 + $0x8] sm:$0xff]
        %v242 = vadd.f32 %v237, %v240
        %v243 = vadd.f32 %v238, %v241
        %244 = vst [vmem:[%s143] sm:$0xff] %v242
        %245 = vst [vmem:[%s143 + $0x8] sm:$0xff] %v243
        %s246 = sand.u32 %s74, 1
        %s247 = scalar_lea.sflag [#allocation6], %s246
        %s248 = sand.u32 %s74, 1
        %s249 = smul.addr %s248, 16
        %s250 = scalar_lea.vmem [#allocation7], %s249
        // Predicated region
        $region33: #{gpt_embedding_forward.1} parent=27 // pred_check
          %p251 = pneg %p84
        $region34: #{gpt_embedding_forward.1} parent=27 // pred_check_branch
          %253 = sbr.rel (%p251) target = $region36
        $region35: #{gpt_embedding_forward.1} parent=27 // pred_region
          %s254 = smul.u32 2, %s24
          %s256 = ssub.s32 256, 256
          %257 = vsyncadd %s247, %s256
          %s258 = smul.addr %s254, 128
          %s259 = scalar_lea.hbm %s3, %s258
          %s260 = sshll.u32 %s250, 4
          %s261 = int_to_ptr.vmem [resolvable:$true] %s260
          %266 = dma.vmem_to_hbm [thread:$0]  %s261, 256, %s259, %s247, 128, 128, 8
        $region36: #{gpt_embedding_forward.1} parent=27 // pred_fallthru
          _
      $region28: #{gpt_embedding_forward.1} parent=5 // pred_fallthru
        _
      %p267 = scmp.le.s32.totalorder 2, %s19
      // Predicated region
      $region37: #{gpt_embedding_forward.1} parent=5 // pred_check
        %p268 = pneg %p267
      $region38: #{gpt_embedding_forward.1} parent=5 // pred_check_branch
        %270 = sbr.rel (%p268) target = $region40
      $region39: #{gpt_embedding_forward.1} parent=5 // pred_region
        %s271 = ssub.s32 %s19, 2
        // Predicated region
        $region41: #{gpt_embedding_forward.1} parent=39 // pred_check
          %p272 = pneg %p90
        $region42: #{gpt_embedding_forward.1} parent=39 // pred_check_branch
          %274 = sbr.rel (%p272) target = $region44
        $region43: #{gpt_embedding_forward.1} parent=39 // pred_region
          %s275 = sand.u32 %s75, 1
          %s276 = scalar_lea.sflag [#allocation6], %s275
          %s277 = sand.u32 %s75, 1
          %s278 = smul.addr %s277, 16
          %s279 = scalar_lea.vmem [#allocation7], %s278
          %280 = dma.done %s276, 256
        $region44: #{gpt_embedding_forward.1} parent=39 // pred_fallthru
          _
      $region40: #{gpt_embedding_forward.1} parent=5 // pred_fallthru
        _
    $region6: #{gpt_embedding_forward.1} parent=1 // loop_footer
      %s23 = sadd.s32 1, %s19
    $region7: #{gpt_embedding_forward.1} parent=1 // loop_footer_branch
      %18 = sbr.rel target = $region3
    $region8: #{gpt_embedding_forward.1} parent=1 // loop_exit
      _
    %281 = vsyncpa [#allocation5], 1
    %s282 = scalar_lea.sflag [#allocation5], 1
    %283 = vsyncpa %s282, 1
    %284 = vsyncpa [#allocation6], 1
    %s285 = scalar_lea.sflag [#allocation6], 1
    %286 = vsyncpa %s285, 1

</llo_original>
